<compile_context>
chip_gen: v5e
topology: v5e:2x2
jax: 0.10.0
libtpu: 0.0.40
codegen_flags: <defaults>
</compile_context>

<pallas_src>
import jax
import jax.numpy as jnp
from jax.experimental import pallas as pl
from jax.experimental.pallas import tpu as pltpu


def rnn_fc_logsoftmax_kernel(x_ref, wih_ref, whh_ref, b_ref, wfc_ref, bfc_ref,
                             out_ref, xproj_ref):
    """Single-invocation kernel: full RNN recurrence + FC + log-softmax.

    x_ref    : (S*B_pad, D)  bf16  time-major, batch-padded, flattened inputs
    wih_ref  : (D, H)        bf16  input->hidden weights (transposed)
    whh_ref  : (H, H)        bf16  hidden->hidden weights (transposed)
    b_ref    : (1, H)        f32   combined bias (b_ih + b_hh)
    wfc_ref  : (H, C_pad)    bf16  classifier weights (transposed, lane-padded with zeros)
    bfc_ref  : (1, C_pad)    f32   classifier bias (padded cols = -1e30 mask)
    out_ref  : (B_pad, C_pad) f32  log-probabilities (valid region [:B, :C])
    xproj_ref: (S*B_pad, H)  f32   VMEM scratch for the hoisted input projection
    """
    B = out_ref.shape[0]                 # padded batch (multiple of 8, sublane width)
    H = whh_ref.shape[0]
    S = x_ref.shape[0] // B

    # Hoisted input projection + combined bias: one big MXU matmul (bf16 ops, f32 acc),
    # written to VMEM scratch so it is not live in vregs across the unrolled recurrence.
    xproj_ref[...] = (
        jnp.dot(x_ref[...], wih_ref[...], preferred_element_type=jnp.float32)
        + b_ref[...]
    )

    w_hh = whh_ref[...]                  # bf16 (128,128): 8 vregs, stays resident

    # TODO(synk): stage W_hh once in the MXU (pltpu.matmul_push_rhs + matmul_acc_lhs /
    # matmul_pop) to avoid re-pushing the 128x128 RHS on each of the 8 serial jnp.dot
    # steps, once that explicit-MXU path is verified on the target chip generation.
    h = jnp.zeros((B, H), jnp.float32)
    for t in range(S):                   # statically unrolled; static, sublane-aligned slices
        z = xproj_ref[t * B:(t + 1) * B, :] + jnp.dot(
            h.astype(jnp.bfloat16), w_hh, preferred_element_type=jnp.float32)
        h = jnp.tanh(z)                  # f32 VPU/EUP (v5e-safe)

    # Classifier + log-softmax on a lane-dense (B_pad, C_pad) tile.  Padded class columns
    # have zero weights and a -1e30 bias, so exp underflows to 0 and the real 4 classes
    # are exact.
    logits = jnp.dot(h.astype(jnp.bfloat16), wfc_ref[...],
                     preferred_element_type=jnp.float32) + bfc_ref[...]
    m = jnp.max(logits, axis=-1, keepdims=True)
    shifted = logits - m
    lse = jnp.log(jnp.sum(jnp.exp(shifted), axis=-1, keepdims=True))
    out_ref[...] = shifted - lse


def rnn_forward(x, w_ih, w_hh, b_ih, b_hh, w_fc, b_fc):
    """x: (B, S, D) batch-first float32; weights in PyTorch layout:
       w_ih (H, D), w_hh (H, H), b_ih/b_hh (H,), w_fc (C, H), b_fc (C,)."""
    B, S, D = x.shape
    H = w_hh.shape[0]
    C = w_fc.shape[0]

    # --- padding for sublane/lane density ---
    B_pad = max(8, -(-B // 8) * 8)        # multiple of 8 (sublane width)
    C_pad = max(128, -(-C // 128) * 128)  # multiple of 128 (lane width)

    x = jnp.asarray(x, jnp.float32)
    x_p = jnp.pad(x, ((0, B_pad - B), (0, 0), (0, 0)))                 # (B_pad, S, D)
    # Time-major flattening: rows [t*B_pad, (t+1)*B_pad) hold timestep t.
    # At B=2, S=8, D=32 this wrapper transpose is noise; for large inputs feed x already
    # time-major so the kernel's HBM traffic is exactly one read of x.
    x_tm = (jnp.transpose(x_p, (1, 0, 2))
            .reshape(S * B_pad, D)
            .astype(jnp.bfloat16))                                     # (S*B_pad, D)

    # MXU operands in bf16; element-wise / transcendental math stays f32 in-kernel.
    wih_t = jnp.asarray(w_ih, jnp.float32).T.astype(jnp.bfloat16)      # (D, H)
    whh_t = jnp.asarray(w_hh, jnp.float32).T.astype(jnp.bfloat16)      # (H, H)
    bias = (jnp.asarray(b_ih, jnp.float32)
            + jnp.asarray(b_hh, jnp.float32)).reshape(1, H)            # (1, H) f32

    # Lane-pad the classifier: zero weight columns, -1e30 bias on padded classes.
    wfc_t = jnp.asarray(w_fc, jnp.float32).T                           # (H, C)
    wfc_p = jnp.pad(wfc_t, ((0, 0), (0, C_pad - C))).astype(jnp.bfloat16)  # (H, C_pad)
    bfc_p = jnp.full((1, C_pad), -1e30, jnp.float32)
    bfc_p = bfc_p.at[0, :C].set(jnp.asarray(b_fc, jnp.float32))        # (1, C_pad)

    # Single invocation, no grid: all operands whole-array resident in VMEM, no pipeline
    # machinery.  (At larger batch a leading "parallel" batch-grid axis would let v7x's
    # second TensorCore split the embarrassingly-parallel recurrence; no-op at B_pad=8.)
    out_padded = pl.pallas_call(
        rnn_fc_logsoftmax_kernel,
        out_shape=jax.ShapeDtypeStruct((B_pad, C_pad), jnp.float32),
        scratch_shapes=[pltpu.VMEM((S * B_pad, H), jnp.float32)],
    )(x_tm, wih_t, whh_t, bias, wfc_p, bfc_p)

    # Slice off batch/class padding outside the kernel.
    return out_padded[:B, :C]


def _reference(x, w_ih, w_hh, b_ih, b_hh, w_fc, b_fc):
    """Pure-JAX f32 reference mirroring the PyTorch forward, for sanity checking."""
    B, S, D = x.shape
    H = w_hh.shape[0]
    h = jnp.zeros((B, H), jnp.float32)
    for t in range(S):
        h = jnp.tanh(x[:, t, :] @ w_ih.T + b_ih + h @ w_hh.T + b_hh)
    logits = h @ w_fc.T + b_fc
    return jax.nn.log_softmax(logits, axis=1)


if __name__ == "__main__":
    # Small shapes consistent with the module: batch=2, seq=8, input=32,
    # hidden=128 (module default), num_classes=4 (the 4 categories).
    B, S, D, H, C = 2, 8, 32, 128, 4

    key = jax.random.PRNGKey(0)
    ks = jax.random.split(key, 7)
    scale = 1.0 / jnp.sqrt(H)
    x = jax.random.normal(ks[0], (B, S, D), jnp.float32)
    w_ih = jax.random.uniform(ks[1], (H, D), jnp.float32, -scale, scale)
    w_hh = jax.random.uniform(ks[2], (H, H), jnp.float32, -scale, scale)
    b_ih = jax.random.uniform(ks[3], (H,), jnp.float32, -scale, scale)
    b_hh = jax.random.uniform(ks[4], (H,), jnp.float32, -scale, scale)
    w_fc = jax.random.uniform(ks[5], (C, H), jnp.float32, -scale, scale)
    b_fc = jax.random.uniform(ks[6], (C,), jnp.float32, -scale, scale)

    out = rnn_forward(x, w_ih, w_hh, b_ih, b_hh, w_fc, b_fc)
    out = jax.block_until_ready(out)

    ref = _reference(x, w_ih, w_hh, b_ih, b_hh, w_fc, b_fc)
    assert out.shape == (B, C)
    # bf16 MXU operands with f32 accumulation -> small (~1e-3) deviation vs the pure-f32
    # reference; 2e-2 tolerance comfortably bounds it while still catching real bugs.
    assert jnp.allclose(out, ref, atol=2e-2, rtol=2e-2), "mismatch vs reference"

    print("KERNEL_OK")
</pallas_src>

<mosaic_0001>
module attributes {stable_mosaic.version = 11 : i64} {
  func.func @rnn_fc_logsoftmax_kernel(%arg0: memref<64x32xbf16, #tpu.memory_space<vmem>>, %arg1: memref<32x128xbf16, #tpu.memory_space<vmem>>, %arg2: memref<128x128xbf16, #tpu.memory_space<vmem>>, %arg3: memref<1x128xf32, #tpu.memory_space<vmem>>, %arg4: memref<128x128xbf16, #tpu.memory_space<vmem>>, %arg5: memref<1x128xf32, #tpu.memory_space<vmem>>, %arg6: memref<8x128xf32, #tpu.memory_space<vmem>>, %arg7: memref<64x128xf32, #tpu.memory_space<vmem>>) attributes {dimension_semantics = [], scalar_prefetch = 0 : i64, scratch_operands = 1 : i64, tpu.core_type = #tpu.core_type<tc>} {
    %c0 = arith.constant 0 : index
    %c0_0 = arith.constant 0 : index
    %0 = vector.load %arg0[%c0, %c0_0] : memref<64x32xbf16, #tpu.memory_space<vmem>>, vector<64x32xbf16>
    %c0_1 = arith.constant 0 : index
    %c0_2 = arith.constant 0 : index
    %1 = vector.load %arg1[%c0_1, %c0_2] : memref<32x128xbf16, #tpu.memory_space<vmem>>, vector<32x128xbf16>
    %cst = arith.constant dense<0.000000e+00> : vector<64x128xf32>
    %2 = tpu.matmul %0, %1, %cst {dimension_numbers = #tpu.dot_dimension_numbers<[1], [0], [0], [1], [0, 0, 1, 1], [], []>} : vector<64x32xbf16>, vector<32x128xbf16>, vector<64x128xf32> -> vector<64x128xf32>
    %c0_3 = arith.constant 0 : index
    %c0_4 = arith.constant 0 : index
    %3 = vector.load %arg3[%c0_3, %c0_4] : memref<1x128xf32, #tpu.memory_space<vmem>>, vector<1x128xf32>
    %4 = vector.broadcast %3 : vector<1x128xf32> to vector<64x128xf32>
    %5 = arith.addf %2, %4 : vector<64x128xf32>
    %c0_5 = arith.constant 0 : index
    %c0_6 = arith.constant 0 : index
    %6 = vector.load %arg7[%c0_5, %c0_6] : memref<64x128xf32, #tpu.memory_space<vmem>>, vector<64x128xf32>
    tpu.vector_store %arg7[%c0_5, %c0_6], %5 {strides = array<i32>} : memref<64x128xf32, #tpu.memory_space<vmem>>, vector<64x128xf32>,
    %c0_7 = arith.constant 0 : index
    %c0_8 = arith.constant 0 : index
    %7 = vector.load %arg2[%c0_7, %c0_8] : memref<128x128xbf16, #tpu.memory_space<vmem>>, vector<128x128xbf16>
    %cst_9 = arith.constant 0.000000e+00 : f32
    %8 = vector.broadcast %cst_9 : f32 to vector<8x128xf32>
    %c0_10 = arith.constant 0 : index
    %c0_11 = arith.constant 0 : index
    %9 = vector.load %arg7[%c0_10, %c0_11] : memref<64x128xf32, #tpu.memory_space<vmem>>, vector<8x128xf32>
    %10 = arith.truncf %8 : vector<8x128xf32> to vector<8x128xbf16>
    %cst_12 = arith.constant dense<0.000000e+00> : vector<8x128xf32>
    %11 = tpu.matmul %10, %7, %cst_12 {dimension_numbers = #tpu.dot_dimension_numbers<[1], [0], [0], [1], [0, 0, 1, 1], [], []>} : vector<8x128xbf16>, vector<128x128xbf16>, vector<8x128xf32> -> vector<8x128xf32>
    %12 = arith.addf %9, %11 : vector<8x128xf32>
    %13 = math.tanh %12 : vector<8x128xf32>
    %c8 = arith.constant 8 : index
    %c0_13 = arith.constant 0 : index
    %14 = vector.load %arg7[%c8, %c0_13] : memref<64x128xf32, #tpu.memory_space<vmem>>, vector<8x128xf32>
    %15 = arith.truncf %13 : vector<8x128xf32> to vector<8x128xbf16>
    %cst_14 = arith.constant dense<0.000000e+00> : vector<8x128xf32>
    %16 = tpu.matmul %15, %7, %cst_14 {dimension_numbers = #tpu.dot_dimension_numbers<[1], [0], [0], [1], [0, 0, 1, 1], [], []>} : vector<8x128xbf16>, vector<128x128xbf16>, vector<8x128xf32> -> vector<8x128xf32>
    %17 = arith.addf %14, %16 : vector<8x128xf32>
    %18 = math.tanh %17 : vector<8x128xf32>
    %c16 = arith.constant 16 : index
    %c0_15 = arith.constant 0 : index
    %19 = vector.load %arg7[%c16, %c0_15] : memref<64x128xf32, #tpu.memory_space<vmem>>, vector<8x128xf32>
    %20 = arith.truncf %18 : vector<8x128xf32> to vector<8x128xbf16>
    %cst_16 = arith.constant dense<0.000000e+00> : vector<8x128xf32>
    %21 = tpu.matmul %20, %7, %cst_16 {dimension_numbers = #tpu.dot_dimension_numbers<[1], [0], [0], [1], [0, 0, 1, 1], [], []>} : vector<8x128xbf16>, vector<128x128xbf16>, vector<8x128xf32> -> vector<8x128xf32>
    %22 = arith.addf %19, %21 : vector<8x128xf32>
    %23 = math.tanh %22 : vector<8x128xf32>
    %c24 = arith.constant 24 : index
    %c0_17 = arith.constant 0 : index
    %24 = vector.load %arg7[%c24, %c0_17] : memref<64x128xf32, #tpu.memory_space<vmem>>, vector<8x128xf32>
    %25 = arith.truncf %23 : vector<8x128xf32> to vector<8x128xbf16>
    %cst_18 = arith.constant dense<0.000000e+00> : vector<8x128xf32>
    %26 = tpu.matmul %25, %7, %cst_18 {dimension_numbers = #tpu.dot_dimension_numbers<[1], [0], [0], [1], [0, 0, 1, 1], [], []>} : vector<8x128xbf16>, vector<128x128xbf16>, vector<8x128xf32> -> vector<8x128xf32>
    %27 = arith.addf %24, %26 : vector<8x128xf32>
    %28 = math.tanh %27 : vector<8x128xf32>
    %c32 = arith.constant 32 : index
    %c0_19 = arith.constant 0 : index
    %29 = vector.load %arg7[%c32, %c0_19] : memref<64x128xf32, #tpu.memory_space<vmem>>, vector<8x128xf32>
    %30 = arith.truncf %28 : vector<8x128xf32> to vector<8x128xbf16>
    %cst_20 = arith.constant dense<0.000000e+00> : vector<8x128xf32>
    %31 = tpu.matmul %30, %7, %cst_20 {dimension_numbers = #tpu.dot_dimension_numbers<[1], [0], [0], [1], [0, 0, 1, 1], [], []>} : vector<8x128xbf16>, vector<128x128xbf16>, vector<8x128xf32> -> vector<8x128xf32>
    %32 = arith.addf %29, %31 : vector<8x128xf32>
    %33 = math.tanh %32 : vector<8x128xf32>
    %c40 = arith.constant 40 : index
    %c0_21 = arith.constant 0 : index
    %34 = vector.load %arg7[%c40, %c0_21] : memref<64x128xf32, #tpu.memory_space<vmem>>, vector<8x128xf32>
    %35 = arith.truncf %33 : vector<8x128xf32> to vector<8x128xbf16>
    %cst_22 = arith.constant dense<0.000000e+00> : vector<8x128xf32>
    %36 = tpu.matmul %35, %7, %cst_22 {dimension_numbers = #tpu.dot_dimension_numbers<[1], [0], [0], [1], [0, 0, 1, 1], [], []>} : vector<8x128xbf16>, vector<128x128xbf16>, vector<8x128xf32> -> vector<8x128xf32>
    %37 = arith.addf %34, %36 : vector<8x128xf32>
    %38 = math.tanh %37 : vector<8x128xf32>
    %c48 = arith.constant 48 : index
    %c0_23 = arith.constant 0 : index
    %39 = vector.load %arg7[%c48, %c0_23] : memref<64x128xf32, #tpu.memory_space<vmem>>, vector<8x128xf32>
    %40 = arith.truncf %38 : vector<8x128xf32> to vector<8x128xbf16>
    %cst_24 = arith.constant dense<0.000000e+00> : vector<8x128xf32>
    %41 = tpu.matmul %40, %7, %cst_24 {dimension_numbers = #tpu.dot_dimension_numbers<[1], [0], [0], [1], [0, 0, 1, 1], [], []>} : vector<8x128xbf16>, vector<128x128xbf16>, vector<8x128xf32> -> vector<8x128xf32>
    %42 = arith.addf %39, %41 : vector<8x128xf32>
    %43 = math.tanh %42 : vector<8x128xf32>
    %c56 = arith.constant 56 : index
    %c0_25 = arith.constant 0 : index
    %44 = vector.load %arg7[%c56, %c0_25] : memref<64x128xf32, #tpu.memory_space<vmem>>, vector<8x128xf32>
    %45 = arith.truncf %43 : vector<8x128xf32> to vector<8x128xbf16>
    %cst_26 = arith.constant dense<0.000000e+00> : vector<8x128xf32>
    %46 = tpu.matmul %45, %7, %cst_26 {dimension_numbers = #tpu.dot_dimension_numbers<[1], [0], [0], [1], [0, 0, 1, 1], [], []>} : vector<8x128xbf16>, vector<128x128xbf16>, vector<8x128xf32> -> vector<8x128xf32>
    %47 = arith.addf %44, %46 : vector<8x128xf32>
    %48 = math.tanh %47 : vector<8x128xf32>
    %49 = arith.truncf %48 : vector<8x128xf32> to vector<8x128xbf16>
    %c0_27 = arith.constant 0 : index
    %c0_28 = arith.constant 0 : index
    %50 = vector.load %arg4[%c0_27, %c0_28] : memref<128x128xbf16, #tpu.memory_space<vmem>>, vector<128x128xbf16>
    %cst_29 = arith.constant dense<0.000000e+00> : vector<8x128xf32>
    %51 = tpu.matmul %49, %50, %cst_29 {dimension_numbers = #tpu.dot_dimension_numbers<[1], [0], [0], [1], [0, 0, 1, 1], [], []>} : vector<8x128xbf16>, vector<128x128xbf16>, vector<8x128xf32> -> vector<8x128xf32>
    %c0_30 = arith.constant 0 : index
    %c0_31 = arith.constant 0 : index
    %52 = vector.load %arg5[%c0_30, %c0_31] : memref<1x128xf32, #tpu.memory_space<vmem>>, vector<1x128xf32>
    %53 = vector.broadcast %52 : vector<1x128xf32> to vector<8x128xf32>
    %54 = arith.addf %51, %53 : vector<8x128xf32>
    %cst_32 = arith.constant dense<0xFF800000> : vector<8xf32>
    %55 = vector.multi_reduction <maximumf>, %54, %cst_32 [1] : vector<8x128xf32> to vector<8xf32>
    %56 = vector.shape_cast %55 : vector<8xf32> to vector<8x1xf32>
    %57 = vector.broadcast %56 : vector<8x1xf32> to vector<8x128xf32>
    %58 = arith.subf %54, %57 : vector<8x128xf32>
    %59 = math.exp %58 : vector<8x128xf32>
    %cst_33 = arith.constant dense<0.000000e+00> : vector<8xf32>
    %60 = vector.multi_reduction <add>, %59, %cst_33 [1] : vector<8x128xf32> to vector<8xf32>
    %61 = vector.shape_cast %60 : vector<8xf32> to vector<8x1xf32>
    %62 = math.log %61 : vector<8x1xf32>
    %63 = vector.broadcast %62 : vector<8x1xf32> to vector<8x128xf32>
    %64 = arith.subf %58, %63 : vector<8x128xf32>
    %c0_34 = arith.constant 0 : index
    %c0_35 = arith.constant 0 : index
    %65 = vector.load %arg6[%c0_34, %c0_35] : memref<8x128xf32, #tpu.memory_space<vmem>>, vector<8x128xf32>
    tpu.vector_store %arg6[%c0_34, %c0_35], %64 {strides = array<i32>} : memref<8x128xf32, #tpu.memory_space<vmem>>, vector<8x128xf32>,
    return
  }
}

</mosaic_0001>

<llo_original>
// kernel: tpu_custom_call.1
$region0: #{tpu_custom_call.1}
  #allocation0 [shape = 'u32[]', space=smem, size = 0x4, offset = 0x4, fixed_abs, tag = 'smem constant byte address 0x4 - core index']
  #allocation1 [shape = 'u32[72,128]{1,0:T(1,128)}', space=vmem, size = 0x9000, scoped, tag = 'internal scratch']
  #allocation2 [shape = 'f32[64,128]{1,0:T(8,128)}', space=vmem, size = 0x8000, scoped, tag = 'scratch operand']
  %s0 = inlined_call_operand.vmem [shape: bf16[64,32], index: 0, kind: input, shape index: {}]
  %s1 = inlined_call_operand.vmem [shape: bf16[32,128], index: 1, kind: input, shape index: {}]
  %s2 = inlined_call_operand.hbm [shape: bf16[128,128], index: 2, kind: input, shape index: {}]
  %s3 = inlined_call_operand.vmem [shape: f32[1,128], index: 3, kind: input, shape index: {}]
  %s4 = inlined_call_operand.hbm [shape: bf16[128,128], index: 4, kind: input, shape index: {}]
  %s5 = inlined_call_operand.vmem [shape: f32[1,128], index: 5, kind: input, shape index: {}]
  %s6 = inlined_call_operand.hbm [shape: f32[8,128], index: 6, kind: output, shape index: {}]
  %s7 = sld [smem:[#allocation0]]
  $region42: #{tpu_custom_call.1} parent=0
    _
  %s9 = ssub.s32 1, %s7
  %s10 = scalar_select 0, %s9, %s7
  $region1: #{tpu_custom_call.1} parent=0
    #allocation3 [shape = 'u8[32768]{0}', space=vmem, size = 0x8000, scoped, tag = 'input window, operand 2, single buffered']
    #allocation4 [shape = 's32[1]{0}', space=sflag, size = 0x4, scoped, tag = 'scoped memory for tpu_custom_call.1']
    #allocation5 [shape = 's32[1]{0}', space=sflag, size = 0x4, scoped, tag = 'scoped memory for tpu_custom_call.1']
    #allocation6 [shape = 'u8[32768]{0}', space=vmem, size = 0x8000, scoped, tag = 'input window, operand 4, single buffered']
    #allocation7 [shape = 's32[1]{0}', space=sflag, size = 0x4, scoped, tag = 'scoped memory for tpu_custom_call.1']
    #allocation8 [shape = 'u8[4096]{0}', space=vmem, size = 0x1000, scoped, tag = 'output window, operand 0, single buffered']
    %11 = vsyncpa [#allocation4], 0
    %12 = vsyncpa [#allocation7], 0
    %13 = vsyncpa [#allocation5], 0
    // Predicated region
    $region2: #{tpu_custom_call.1} parent=1 // pred_check
      _
    $region3: #{tpu_custom_call.1} parent=1 // pred_check_branch
      %15 = sbr.rel (0) target = $region5
    $region4: #{tpu_custom_call.1} parent=1 // pred_region
      _
    $region5: #{tpu_custom_call.1} parent=1 // pred_fallthru
      _
    // Predicated region
    $region6: #{tpu_custom_call.1} parent=1 // pred_check
      _
    $region7: #{tpu_custom_call.1} parent=1 // pred_check_branch
      %17 = sbr.rel (0) target = $region9
    $region8: #{tpu_custom_call.1} parent=1 // pred_region
      _
    $region9: #{tpu_custom_call.1} parent=1 // pred_fallthru
      _
    // Predicated region
    $region10: #{tpu_custom_call.1} parent=1 // pred_check
      _
    $region11: #{tpu_custom_call.1} parent=1 // pred_check_branch
      %19 = sbr.rel (0) target = $region13
    $region12: #{tpu_custom_call.1} parent=1 // pred_region
      %21 = vsyncadd [#allocation4], 0
      %s22 = sshll.u32 %s2, 4
      %s23 = int_to_ptr.hbm [resolvable:$true] %s22
      %s24 = sshll.u32 [#allocation3], 4
      %s25 = int_to_ptr.vmem [resolvable:$true] %s24
      %30 = dma.hbm_to_vmem [thread:$0]  %s23, 1024, %s25, [#allocation4], 64, 64, 4
    $region13: #{tpu_custom_call.1} parent=1 // pred_fallthru
      _
    // Predicated region
    $region14: #{tpu_custom_call.1} parent=1 // pred_check
      _
    $region15: #{tpu_custom_call.1} parent=1 // pred_check_branch
      %32 = sbr.rel (0) target = $region17
    $region16: #{tpu_custom_call.1} parent=1 // pred_region
      _
    $region17: #{tpu_custom_call.1} parent=1 // pred_fallthru
      _
    // Predicated region
    $region18: #{tpu_custom_call.1} parent=1 // pred_check
      _
    $region19: #{tpu_custom_call.1} parent=1 // pred_check_branch
      %34 = sbr.rel (0) target = $region21
    $region20: #{tpu_custom_call.1} parent=1 // pred_region
      %36 = vsyncadd [#allocation7], 0
      %s37 = sshll.u32 %s4, 4
      %s38 = int_to_ptr.hbm [resolvable:$true] %s37
      %s39 = sshll.u32 [#allocation6], 4
      %s40 = int_to_ptr.vmem [resolvable:$true] %s39
      %45 = dma.hbm_to_vmem [thread:$0]  %s38, 1024, %s40, [#allocation7], 64, 64, 4
    $region21: #{tpu_custom_call.1} parent=1 // pred_fallthru
      _
    // Predicated region
    $region22: #{tpu_custom_call.1} parent=1 // pred_check
      _
    $region23: #{tpu_custom_call.1} parent=1 // pred_check_branch
      %47 = sbr.rel (0) target = $region25
    $region24: #{tpu_custom_call.1} parent=1 // pred_region
      _
    $region25: #{tpu_custom_call.1} parent=1 // pred_fallthru
      _
    // Predicated region
    $region26: #{tpu_custom_call.1} parent=1 // pred_check
      _
    $region27: #{tpu_custom_call.1} parent=1 // pred_check_branch
      %49 = sbr.rel (0) target = $region29
    $region28: #{tpu_custom_call.1} parent=1 // pred_region
      %51 = dma.done [#allocation4], 1024
    $region29: #{tpu_custom_call.1} parent=1 // pred_fallthru
      _
    // Predicated region
    $region30: #{tpu_custom_call.1} parent=1 // pred_check
      _
    $region31: #{tpu_custom_call.1} parent=1 // pred_check_branch
      %53 = sbr.rel (0) target = $region33
    $region32: #{tpu_custom_call.1} parent=1 // pred_region
      %55 = dma.done [#allocation7], 1024
    $region33: #{tpu_custom_call.1} parent=1 // pred_fallthru
      _
    %v57 = vld [vmem:[%s0] sm:$0xf]
    %v58 = vld [vmem:[%s0 + $0x4] sm:$0xf]
    %v59 = vld [vmem:[%s0 + $0x8] sm:$0xf]
    %v60 = vld [vmem:[%s0 + $0xc] sm:$0xf]
    %v61 = vld [vmem:[%s0 + $0x10] sm:$0xf]
    %v62 = vld [vmem:[%s0 + $0x14] sm:$0xf]
    %v63 = vld [vmem:[%s0 + $0x18] sm:$0xf]
    %v64 = vld [vmem:[%s0 + $0x1c] sm:$0xf]
    %v65 = vld [vmem:[%s1] sm:$0xf]
    %v66 = vld [vmem:[%s1 + $0x4] sm:$0xf]
    %v67 = vld [vmem:[%s1 + $0x8] sm:$0xf]
    %v68 = vld [vmem:[%s1 + $0xc] sm:$0xf]
    %v69 = vld [vmem:[%s3] sm:$0x1]
    %v71 = vperm.slane %v69, 0
    %v81 = vunpack.c.l.b16 %v57
    %v82 = vunpack.c.l.b16 %v58
    %v83 = vunpack.c.l.b16 %v59
    %v84 = vunpack.c.l.b16 %v60
    %v85 = vunpack.c.l.b16 %v61
    %v86 = vunpack.c.l.b16 %v62
    %v87 = vunpack.c.l.b16 %v63
    %v88 = vunpack.c.l.b16 %v64
    %v89 = vpack.c.b16 %v82, %v81
    %v90 = vpack.c.b16 %v84, %v83
    %v91 = vpack.c.b16 %v86, %v85
    %v92 = vpack.c.b16 %v88, %v87
    %v97 = vunpack.c.l.b16 %v65
    %v98 = vunpack.c.l.b16 %v66
    %v99 = vunpack.c.l.b16 %v67
    %v100 = vunpack.c.l.b16 %v68
    %v101 = vpack.c.b16 %v98, %v97
    %v102 = vpack.c.b16 %v100, %v99
    %vm105 = vcmask 261120
    %v107 = vsel %vm105, %v89, 0
    %v110 = vsel %vm105, %v90, 0
    %v113 = vsel %vm105, %v91, 0
    %v116 = vsel %vm105, %v92, 0
    %118 = vmatpush.bf16.msra.mxu0 0
    %119 = vmatpush.bf16.msra.mxu0 0
    %120 = vmatpush.bf16.msra.mxu0 0
    %121 = vmatpush.bf16.msra.mxu0 0
    %122 = vmatpush.bf16.msra.mxu0 0
    %123 = vmatpush.bf16.msra.mxu0 0
    %124 = vmatpush.bf16.msra.mxu0 %v102
    %125 = vmatpush.bf16.msra.mxu0 %v101
    %126 = vmatmul.bf16.gmra.mxu0 %v107
    %v127 = vpop.f32.mrf.mxu0
    %v128 = vadd.f32 %v71, %v127
    %v129 = vpop.f32.mrf.mxu0
    %v130 = vadd.f32 %v71, %v129
    %131 = vmatmul.bf16.gmra.mxu0 %v110
    %v132 = vpop.f32.mrf.mxu0
    %v133 = vadd.f32 %v71, %v132
    %v134 = vpop.f32.mrf.mxu0
    %v135 = vadd.f32 %v71, %v134
    %136 = vmatmul.bf16.gmra.mxu0 %v113
    %v137 = vpop.f32.mrf.mxu0
    %v138 = vadd.f32 %v71, %v137
    %v139 = vpop.f32.mrf.mxu0
    %v140 = vadd.f32 %v71, %v139
    %141 = vmatmul.bf16.gmra.mxu0 %v116
    %v142 = vpop.f32.mrf.mxu0
    %v143 = vadd.f32 %v71, %v142
    %v144 = vpop.f32.mrf.mxu0
    %v145 = vadd.f32 %v71, %v144
    %146 = vdwg.mxu0
    %147 = vst [vmem:[#allocation2] sm:$0xff] %v128
    %148 = vst [vmem:[#allocation2 + $0x8] sm:$0xff] %v130
    %149 = vst [vmem:[#allocation2 + $0x10] sm:$0xff] %v133
    %150 = vst [vmem:[#allocation2 + $0x18] sm:$0xff] %v135
    %151 = vst [vmem:[#allocation2 + $0x20] sm:$0xff] %v138
    %152 = vst [vmem:[#allocation2 + $0x28] sm:$0xff] %v140
    %153 = vst [vmem:[#allocation2 + $0x30] sm:$0xff] %v143
    %154 = vst [vmem:[#allocation2 + $0x38] sm:$0xff] %v145
    %v155 = vld [vmem:[#allocation3] sm:$0xf]
    %v156 = vld [vmem:[#allocation3 + $0x4] sm:$0xf]
    %v157 = vld [vmem:[#allocation3 + $0x8] sm:$0xf]
    %v158 = vld [vmem:[#allocation3 + $0xc] sm:$0xf]
    %v159 = vld [vmem:[#allocation3 + $0x10] sm:$0xf]
    %v160 = vld [vmem:[#allocation3 + $0x14] sm:$0xf]
    %v161 = vld [vmem:[#allocation3 + $0x18] sm:$0xf]
    %v162 = vld [vmem:[#allocation3 + $0x1c] sm:$0xf]
    %v163 = vld [vmem:[#allocation3 + $0x20] sm:$0xf]
    %v164 = vld [vmem:[#allocation3 + $0x24] sm:$0xf]
    %v165 = vld [vmem:[#allocation3 + $0x28] sm:$0xf]
    %v166 = vld [vmem:[#allocation3 + $0x2c] sm:$0xf]
    %v167 = vld [vmem:[#allocation3 + $0x30] sm:$0xf]
    %v168 = vld [vmem:[#allocation3 + $0x34] sm:$0xf]
    %v169 = vld [vmem:[#allocation3 + $0x38] sm:$0xf]
    %v170 = vld [vmem:[#allocation3 + $0x3c] sm:$0xf]
    %v171 = vld [vmem:[#allocation2] sm:$0xff]
    %v188 = vunpack.c.l.b16 %v155
    %v189 = vunpack.c.l.b16 %v156
    %v190 = vunpack.c.l.b16 %v157
    %v191 = vunpack.c.l.b16 %v158
    %v192 = vunpack.c.l.b16 %v159
    %v193 = vunpack.c.l.b16 %v160
    %v194 = vunpack.c.l.b16 %v161
    %v195 = vunpack.c.l.b16 %v162
    %v196 = vunpack.c.l.b16 %v163
    %v197 = vunpack.c.l.b16 %v164
    %v198 = vunpack.c.l.b16 %v165
    %v199 = vunpack.c.l.b16 %v166
    %v200 = vunpack.c.l.b16 %v167
    %v201 = vunpack.c.l.b16 %v168
    %v202 = vunpack.c.l.b16 %v169
    %v203 = vunpack.c.l.b16 %v170
    %v204 = vpack.c.b16 %v189, %v188
    %v205 = vpack.c.b16 %v191, %v190
    %v206 = vpack.c.b16 %v193, %v192
    %v207 = vpack.c.b16 %v195, %v194
    %v208 = vpack.c.b16 %v197, %v196
    %v209 = vpack.c.b16 %v199, %v198
    %v210 = vpack.c.b16 %v201, %v200
    %v211 = vpack.c.b16 %v203, %v202
    %220 = vmatpush.bf16.msra.mxu0 %v211
    %221 = vmatpush.bf16.msra.mxu0 %v210
    %222 = vmatpush.bf16.msra.mxu0 %v209
    %223 = vmatpush.bf16.msra.mxu0 %v208
    %224 = vmatpush.bf16.msra.mxu0 %v207
    %225 = vmatpush.bf16.msra.mxu0 %v206
    %226 = vmatpush.bf16.msra.mxu0 %v205
    %227 = vmatpush.bf16.msra.mxu0 %v204
    %228 = vmatmul.bf16.gmra.mxu0 0
    %v229 = vpop.f32.mrf.mxu0
    %v230 = vadd.f32 0.0, %v229
    %v231 = vpop.f32.mrf.mxu0
    %232 = vdwg.mxu0
    %v233 = vadd.f32 %v171, %v230
    %v234 = vtanh.pop %v233
    %v235 = vld [vmem:[#allocation2 + $0x8] sm:$0xff]
    %v236 = vpack.c.bf16 %v234, %v234
    %237 = vmatpush.bf16.msra.mxu0 %v211
    %238 = vmatpush.bf16.msra.mxu0 %v210
    %239 = vmatpush.bf16.msra.mxu0 %v209
    %240 = vmatpush.bf16.msra.mxu0 %v208
    %241 = vmatpush.bf16.msra.mxu0 %v207
    %242 = vmatpush.bf16.msra.mxu0 %v206
    %243 = vmatpush.bf16.msra.mxu0 %v205
    %244 = vmatpush.bf16.msra.mxu0 %v204
    %245 = vmatmul.bf16.gmra.mxu0 %v236
    %v246 = vpop.f32.mrf.mxu0
    %v247 = vadd.f32 0.0, %v246
    %v248 = vpop.f32.mrf.mxu0
    %249 = vdwg.mxu0
    %v250 = vadd.f32 %v235, %v247
    %v251 = vtanh.pop %v250
    %v252 = vld [vmem:[#allocation2 + $0x10] sm:$0xff]
    %v253 = vpack.c.bf16 %v251, %v251
    %254 = vmatpush.bf16.msra.mxu0 %v211
    %255 = vmatpush.bf16.msra.mxu0 %v210
    %256 = vmatpush.bf16.msra.mxu0 %v209
    %257 = vmatpush.bf16.msra.mxu0 %v208
    %258 = vmatpush.bf16.msra.mxu0 %v207
    %259 = vmatpush.bf16.msra.mxu0 %v206
    %260 = vmatpush.bf16.msra.mxu0 %v205
    %261 = vmatpush.bf16.msra.mxu0 %v204
    %262 = vmatmul.bf16.gmra.mxu0 %v253
    %v263 = vpop.f32.mrf.mxu0
    %v264 = vadd.f32 0.0, %v263
    %v265 = vpop.f32.mrf.mxu0
    %266 = vdwg.mxu0
    %v267 = vadd.f32 %v252, %v264
    %v268 = vtanh.pop %v267
    %v269 = vld [vmem:[#allocation2 + $0x18] sm:$0xff]
    %v270 = vpack.c.bf16 %v268, %v268
    %271 = vmatpush.bf16.msra.mxu0 %v211
    %272 = vmatpush.bf16.msra.mxu0 %v210
    %273 = vmatpush.bf16.msra.mxu0 %v209
    %274 = vmatpush.bf16.msra.mxu0 %v208
    %275 = vmatpush.bf16.msra.mxu0 %v207
    %276 = vmatpush.bf16.msra.mxu0 %v206
    %277 = vmatpush.bf16.msra.mxu0 %v205
    %278 = vmatpush.bf16.msra.mxu0 %v204
    %279 = vmatmul.bf16.gmra.mxu0 %v270
    %v280 = vpop.f32.mrf.mxu0
    %v281 = vadd.f32 0.0, %v280
    %v282 = vpop.f32.mrf.mxu0
    %283 = vdwg.mxu0
    %v284 = vadd.f32 %v269, %v281
    %v285 = vtanh.pop %v284
    %v286 = vld [vmem:[#allocation2 + $0x20] sm:$0xff]
    %v287 = vpack.c.bf16 %v285, %v285
    %288 = vmatpush.bf16.msra.mxu0 %v211
    %289 = vmatpush.bf16.msra.mxu0 %v210
    %290 = vmatpush.bf16.msra.mxu0 %v209
    %291 = vmatpush.bf16.msra.mxu0 %v208
    %292 = vmatpush.bf16.msra.mxu0 %v207
    %293 = vmatpush.bf16.msra.mxu0 %v206
    %294 = vmatpush.bf16.msra.mxu0 %v205
    %295 = vmatpush.bf16.msra.mxu0 %v204
    %296 = vmatmul.bf16.gmra.mxu0 %v287
    %v297 = vpop.f32.mrf.mxu0
    %v298 = vadd.f32 0.0, %v297
    %v299 = vpop.f32.mrf.mxu0
    %300 = vdwg.mxu0
    %v301 = vadd.f32 %v286, %v298
    %v302 = vtanh.pop %v301
    %v303 = vld [vmem:[#allocation2 + $0x28] sm:$0xff]
    %v304 = vpack.c.bf16 %v302, %v302
    %305 = vmatpush.bf16.msra.mxu0 %v211
    %306 = vmatpush.bf16.msra.mxu0 %v210
    %307 = vmatpush.bf16.msra.mxu0 %v209
    %308 = vmatpush.bf16.msra.mxu0 %v208
    %309 = vmatpush.bf16.msra.mxu0 %v207
    %310 = vmatpush.bf16.msra.mxu0 %v206
    %311 = vmatpush.bf16.msra.mxu0 %v205
    %312 = vmatpush.bf16.msra.mxu0 %v204
    %313 = vmatmul.bf16.gmra.mxu0 %v304
    %v314 = vpop.f32.mrf.mxu0
    %v315 = vadd.f32 0.0, %v314
    %v316 = vpop.f32.mrf.mxu0
    %317 = vdwg.mxu0
    %v318 = vadd.f32 %v303, %v315
    %v319 = vtanh.pop %v318
    %v320 = vld [vmem:[#allocation2 + $0x30] sm:$0xff]
    %v321 = vpack.c.bf16 %v319, %v319
    %322 = vmatpush.bf16.msra.mxu0 %v211
    %323 = vmatpush.bf16.msra.mxu0 %v210
    %324 = vmatpush.bf16.msra.mxu0 %v209
    %325 = vmatpush.bf16.msra.mxu0 %v208
    %326 = vmatpush.bf16.msra.mxu0 %v207
    %327 = vmatpush.bf16.msra.mxu0 %v206
    %328 = vmatpush.bf16.msra.mxu0 %v205
    %329 = vmatpush.bf16.msra.mxu0 %v204
    %330 = vmatmul.bf16.gmra.mxu0 %v321
    %v331 = vpop.f32.mrf.mxu0
    %v332 = vadd.f32 0.0, %v331
    %v333 = vpop.f32.mrf.mxu0
    %334 = vdwg.mxu0
    %v335 = vadd.f32 %v320, %v332
    %v336 = vtanh.pop %v335
    %v337 = vld [vmem:[#allocation2 + $0x38] sm:$0xff]
    %v338 = vpack.c.bf16 %v336, %v336
    %339 = vmatpush.bf16.msra.mxu0 %v211
    %340 = vmatpush.bf16.msra.mxu0 %v210
    %341 = vmatpush.bf16.msra.mxu0 %v209
    %342 = vmatpush.bf16.msra.mxu0 %v208
    %343 = vmatpush.bf16.msra.mxu0 %v207
    %344 = vmatpush.bf16.msra.mxu0 %v206
    %345 = vmatpush.bf16.msra.mxu0 %v205
    %346 = vmatpush.bf16.msra.mxu0 %v204
    %347 = vmatmul.bf16.gmra.mxu0 %v338
    %v348 = vpop.f32.mrf.mxu0
    %v349 = vadd.f32 0.0, %v348
    %v350 = vpop.f32.mrf.mxu0
    %351 = vdwg.mxu0
    %v352 = vadd.f32 %v337, %v349
    %v353 = vtanh.pop %v352
    %v354 = vpack.c.bf16 %v353, %v353
    %v355 = vld [vmem:[#allocation6] sm:$0xf]
    %v356 = vld [vmem:[#allocation6 + $0x4] sm:$0xf]
    %v357 = vld [vmem:[#allocation6 + $0x8] sm:$0xf]
    %v358 = vld [vmem:[#allocation6 + $0xc] sm:$0xf]
    %v359 = vld [vmem:[#allocation6 + $0x10] sm:$0xf]
    %v360 = vld [vmem:[#allocation6 + $0x14] sm:$0xf]
    %v361 = vld [vmem:[#allocation6 + $0x18] sm:$0xf]
    %v362 = vld [vmem:[#allocation6 + $0x1c] sm:$0xf]
    %v363 = vld [vmem:[#allocation6 + $0x20] sm:$0xf]
    %v364 = vld [vmem:[#allocation6 + $0x24] sm:$0xf]
    %v365 = vld [vmem:[#allocation6 + $0x28] sm:$0xf]
    %v366 = vld [vmem:[#allocation6 + $0x2c] sm:$0xf]
    %v367 = vld [vmem:[#allocation6 + $0x30] sm:$0xf]
    %v368 = vld [vmem:[#allocation6 + $0x34] sm:$0xf]
    %v369 = vld [vmem:[#allocation6 + $0x38] sm:$0xf]
    %v370 = vld [vmem:[#allocation6 + $0x3c] sm:$0xf]
    %v371 = vld [vmem:[%s5] sm:$0x1]
    %v373 = vperm.slane %v371, 0
    %v391 = vunpack.c.l.b16 %v355
    %v392 = vunpack.c.l.b16 %v356
    %v393 = vunpack.c.l.b16 %v357
    %v394 = vunpack.c.l.b16 %v358
    %v395 = vunpack.c.l.b16 %v359
    %v396 = vunpack.c.l.b16 %v360
    %v397 = vunpack.c.l.b16 %v361
    %v398 = vunpack.c.l.b16 %v362
    %v399 = vunpack.c.l.b16 %v363
    %v400 = vunpack.c.l.b16 %v364
    %v401 = vunpack.c.l.b16 %v365
    %v402 = vunpack.c.l.b16 %v366
    %v403 = vunpack.c.l.b16 %v367
    %v404 = vunpack.c.l.b16 %v368
    %v405 = vunpack.c.l.b16 %v369
    %v406 = vunpack.c.l.b16 %v370
    %v407 = vpack.c.b16 %v392, %v391
    %v408 = vpack.c.b16 %v394, %v393
    %v409 = vpack.c.b16 %v396, %v395
    %v410 = vpack.c.b16 %v398, %v397
    %v411 = vpack.c.b16 %v400, %v399
    %v412 = vpack.c.b16 %v402, %v401
    %v413 = vpack.c.b16 %v404, %v403
    %v414 = vpack.c.b16 %v406, %v405
    %423 = vmatpush.bf16.msra.mxu0 %v414
    %424 = vmatpush.bf16.msra.mxu0 %v413
    %425 = vmatpush.bf16.msra.mxu0 %v412
    %426 = vmatpush.bf16.msra.mxu0 %v411
    %427 = vmatpush.bf16.msra.mxu0 %v410
    %428 = vmatpush.bf16.msra.mxu0 %v409
    %429 = vmatpush.bf16.msra.mxu0 %v408
    %430 = vmatpush.bf16.msra.mxu0 %v407
    %431 = vmatmul.bf16.gmra.mxu0 %v354
    %v432 = vpop.f32.mrf.mxu0
    %v433 = vadd.f32 %v373, %v432
    %v434 = vpop.f32.mrf.mxu0
    %435 = vdwg.mxu0
    %436 = vmax.xlane.f32.xlu0 %v433
    %v437 = vpop.xlane.xlu0 %436
    %v438 = vsub.f32 %v433, %v437
    %v439 = vmul.f32 %v438, 1.442695
    %v440 = vpow.pop %v439
    %441 = vadd.xlane.f32.xlu0 %v440
    %v442 = vpop.xlane.xlu0 %441
    %v443 = vlog2.pop %v442
    %v444 = vmul.f32 %v443, 0.6931472
    %v445 = vsub.f32 %v438, %v444
    %446 = vst [vmem:[#allocation8] sm:$0xff] %v445
    // Predicated region
    $region34: #{tpu_custom_call.1} parent=1 // pred_check
      _
    $region35: #{tpu_custom_call.1} parent=1 // pred_check_branch
      %448 = sbr.rel (0) target = $region37
    $region36: #{tpu_custom_call.1} parent=1 // pred_region
      %450 = vsyncadd [#allocation5], 0
      %s452 = sshll.u32 [#allocation8], 4
      %s453 = int_to_ptr.vmem [resolvable:$true] %s452
      %s454 = sshll.u32 %s6, 4
      %s455 = int_to_ptr.hbm [resolvable:$true] %s454
      %457 = dma.vmem_to_hbm [thread:$0]  %s453, 128, %s455, [#allocation5]
    $region37: #{tpu_custom_call.1} parent=1 // pred_fallthru
      _
    // Predicated region
    $region38: #{tpu_custom_call.1} parent=1 // pred_check
      _
    $region39: #{tpu_custom_call.1} parent=1 // pred_check_branch
      %459 = sbr.rel (0) target = $region41
    $region40: #{tpu_custom_call.1} parent=1 // pred_region
      %461 = dma.done [#allocation5], 128
    $region41: #{tpu_custom_call.1} parent=1 // pred_fallthru
      _
    %462 = vsyncpa [#allocation4], 1
    %463 = vsyncpa [#allocation7], 1
    %464 = vsyncpa [#allocation5], 1

</llo_original>
